<compile_context>
chip_gen: v7x
topology: tpu7x:2x2x1
jax: 0.10.0
libtpu: 0.0.40
codegen_flags: <defaults>
</compile_context>

<pallas_src>
import jax
import jax.numpy as jnp
from jax.experimental import pallas as pl
from jax.experimental.pallas import tpu as pltpu

N_IMAGES = 2
N_FACTS = 20
NR_CLASSES = 19
LANE = 128                 # padded class width (output lanes)
WIDE = N_IMAGES * LANE     # 256: both digit encoders live side-by-side in lanes


def _mnistnn_kernel(x_ref, w1_ref, b1_ref, w2_ref, b2_ref, w3_ref, b3_ref,
                    py_ref):
    """One batch block. Both digits are encoded in the lane dimension via
    block-diagonal weights, so every matmul is 256-wide (full MXU fill) and
    x needs no de-interleave."""
    x = x_ref[...]                                           # (tb, in_pad) bf16

    # layer 1: (tb, in_pad) @ (in_pad, 256) -- block-diagonal shared encoder
    h = jnp.dot(x, w1_ref[...], preferred_element_type=jnp.float32) + b1_ref[...]
    h = jnp.maximum(h, 0.0).astype(jnp.bfloat16)             # (tb, 256)

    # layer 2: (tb, 256) @ (256, 256) block-diagonal
    e = jnp.dot(h, w2_ref[...], preferred_element_type=jnp.float32) + b2_ref[...]
    e = jnp.maximum(e, 0.0).astype(jnp.bfloat16)             # (tb, 256)

    # classify(concat([e1, e2])): single (256, 128) matmul
    logits = (jnp.dot(e, w3_ref[...], preferred_element_type=jnp.float32)
              + b3_ref[...])                                 # padded cols: -1e9 bias

    # numerically stable softmax; exact reciprocal (cheap at this scale)
    m = jnp.max(logits, axis=-1, keepdims=True)
    p = jnp.exp(logits - m)
    inv = pl.reciprocal(jnp.sum(p, axis=-1, keepdims=True), approx=False)
    py_ref[...] = (p * inv).astype(py_ref.dtype)


def mnistnn_forward(x, params, *, block_b=2048):
    """x: (B, C, H, W) NCHW with W = n_images * Wimg.  Returns dict CS/YS/pCS."""
    B, C, H, W = x.shape
    assert W % N_IMAGES == 0
    in_dim = C * H * W                       # contiguous flatten (both digits)
    in_pad = params["w1"].shape[0]
    assert in_pad == pl.cdiv(in_dim, LANE) * LANE

    # batch block: multiple of 8 sublanes, large to amortize per-step overhead
    tb = min(block_b, max(8, pl.cdiv(B, 8) * 8))
    tb = pl.cdiv(tb, 8) * 8
    # v7x megacore: with a single "parallel" grid axis, make >=2 blocks when
    # the batch allows it so both TensorCores get work.
    if B >= 16 and pl.cdiv(B, tb) < 2:
        tb = pl.cdiv(pl.cdiv(B, 2), 8) * 8
    b_pad = pl.cdiv(B, tb) * tb
    nb = b_pad // tb

    # free contiguous flatten + bf16 cast; no transpose / de-interleave pass
    xb = x.astype(jnp.bfloat16).reshape(B, in_dim)
    if b_pad != B or in_pad != in_dim:
        xb = jnp.pad(xb, ((0, b_pad - B), (0, in_pad - in_dim)))

    # advisory cost estimate (whole call)
    flops = 2 * b_pad * (in_pad * WIDE + WIDE * WIDE + WIDE * LANE)
    bytes_accessed = (int(xb.size) * 2
                      + sum(int(v.size) * v.dtype.itemsize for v in params.values())
                      + b_pad * LANE * 2)
    cost = pl.CostEstimate(flops=flops, transcendentals=b_pad * LANE,
                           bytes_accessed=bytes_accessed)

    const = lambda i: (0, 0)
    py_pad = pl.pallas_call(
        _mnistnn_kernel,
        out_shape=jax.ShapeDtypeStruct((b_pad, LANE), jnp.bfloat16),
        grid=(nb,),
        in_specs=[
            pl.BlockSpec((tb, in_pad), lambda i: (i, 0)),    # x block
            pl.BlockSpec((in_pad, WIDE), const),             # w1 (block-diag)
            pl.BlockSpec((1, WIDE), const),                  # b1
            pl.BlockSpec((WIDE, WIDE), const),               # w2 (block-diag)
            pl.BlockSpec((1, WIDE), const),                  # b2
            pl.BlockSpec((WIDE, LANE), const),               # w3 (classify)
            pl.BlockSpec((1, LANE), const),                  # b3
        ],
        out_specs=pl.BlockSpec((tb, LANE), lambda i: (i, 0)),
        compiler_params=pltpu.CompilerParams(
            dimension_semantics=("parallel",),
            vmem_limit_bytes=32 * 1024 * 1024),
        cost_estimate=cost,
    )(xb, params["w1"], params["b1"], params["w2"], params["b2"],
      params["w3"], params["b3"])

    py = py_pad[:B, :NR_CLASSES].astype(jnp.float32)

    cs = jnp.full((B, N_IMAGES, N_FACTS), -1.0, dtype=jnp.float32)
    pcs = jnp.full((B, N_IMAGES, N_FACTS), 1.0 / N_FACTS, dtype=jnp.float32)
    return {"CS": cs, "YS": py, "pCS": pcs}


def init_params(key, C, H, w_img, hidden=32, emb=16):
    """Deterministic synthetic encoder / classify weights.

    The shared per-image encoder weights are folded into block-diagonal
    matrices laid out to match the *contiguous* NCHW flatten of x
    (c, h, [img0 cols | img1 cols]) so the forward never transposes x.
    """
    # TODO(synk): original `encoder` is injected externally; a deterministic MLP
    # encoder + linear classify head stands in for it here.
    k1, k2, k3 = jax.random.split(key, 3)
    in_img = C * H * w_img
    scale = lambda fan_in: 1.0 / jnp.sqrt(jnp.float32(fan_in))
    w1 = (jax.random.normal(k1, (in_img, hidden), jnp.float32)
          * scale(in_img)).astype(jnp.bfloat16)
    w2 = (jax.random.normal(k2, (hidden, emb), jnp.float32)
          * scale(hidden)).astype(jnp.bfloat16)
    w3 = (jax.random.normal(k3, (N_IMAGES * emb, NR_CLASSES), jnp.float32)
          * scale(N_IMAGES * emb)).astype(jnp.bfloat16)

    W = N_IMAGES * w_img
    in_dim = C * H * W
    in_pad = pl.cdiv(in_dim, LANE) * LANE

    # layer 1: block-diagonal over the two digits, row order = NCHW flatten
    w1_r = w1.reshape(C, H, w_img, hidden)
    w1_full = jnp.zeros((C, H, N_IMAGES, w_img, WIDE), jnp.bfloat16)
    w1_full = w1_full.at[:, :, 0, :, 0:hidden].set(w1_r)
    w1_full = w1_full.at[:, :, 1, :, LANE:LANE + hidden].set(w1_r)
    w1_full = w1_full.reshape(in_dim, WIDE)
    if in_pad != in_dim:
        w1_full = jnp.pad(w1_full, ((0, in_pad - in_dim), (0, 0)))

    # layer 2: block-diagonal (256, 256)
    w2_full = jnp.zeros((WIDE, WIDE), jnp.bfloat16)
    w2_full = w2_full.at[0:hidden, 0:emb].set(w2)
    w2_full = w2_full.at[LANE:LANE + hidden, LANE:LANE + emb].set(w2)

    # classify head: single (256, 128) matmul replacing the w3a/w3b pair
    w3_full = jnp.zeros((WIDE, LANE), jnp.bfloat16)
    w3_full = w3_full.at[0:emb, 0:NR_CLASSES].set(w3[:emb])
    w3_full = w3_full.at[LANE:LANE + emb, 0:NR_CLASSES].set(w3[emb:])

    # padded (fake) class columns get a large negative bias -> softmax prob ~ 0
    b3 = jnp.full((1, LANE), -1e9, jnp.float32).at[0, :NR_CLASSES].set(0.0)

    params = {
        "w1": w1_full, "b1": jnp.zeros((1, WIDE), jnp.float32),
        "w2": w2_full, "b2": jnp.zeros((1, WIDE), jnp.float32),
        "w3": w3_full, "b3": b3,
    }
    raw = {"w1": w1, "w2": w2, "w3": w3}
    return params, raw


def _reference_forward(x, raw):
    """Pure-JAX per-image reference (same bf16 weights) for validation."""
    B, C, H, W = x.shape
    w_img = W // N_IMAGES
    in_img = C * H * w_img
    xs = jnp.split(x.astype(jnp.bfloat16), N_IMAGES, axis=-1)
    es = []
    for xi in xs:
        xi = xi.reshape(B, in_img)
        h = jnp.maximum(
            jnp.dot(xi, raw["w1"], preferred_element_type=jnp.float32), 0.0
        ).astype(jnp.bfloat16)
        e = jnp.maximum(
            jnp.dot(h, raw["w2"], preferred_element_type=jnp.float32), 0.0
        ).astype(jnp.bfloat16)
        es.append(e)
    logits = jnp.dot(jnp.concatenate(es, axis=-1), raw["w3"],
                     preferred_element_type=jnp.float32)
    return jax.nn.softmax(logits, axis=-1)


if __name__ == "__main__":
    key = jax.random.PRNGKey(0)
    kx, kp = jax.random.split(key)

    # small MNIST-like pair of digits: B=2, C=1, H=16, W = 2*16 (two 16x16 digits)
    B, C, H, Wimg = 2, 1, 16, 16
    x = jax.random.normal(kx, (B, C, H, N_IMAGES * Wimg), jnp.float32)

    params, raw = init_params(kp, C, H, Wimg)

    out = mnistnn_forward(x, params)
    jax.block_until_ready(out)

    assert out["CS"].shape == (B, N_IMAGES, N_FACTS)
    assert out["pCS"].shape == (B, N_IMAGES, N_FACTS)
    assert out["YS"].shape == (B, NR_CLASSES)
    # softmax rows sum to ~1 (bf16 store of the probabilities)
    assert jnp.allclose(jnp.sum(out["YS"], axis=-1), 1.0, atol=1e-2)
    # matches a pure-JAX per-image reference built from the same bf16 weights
    ref = _reference_forward(x, raw)
    assert jnp.allclose(out["YS"], ref, atol=2e-2)
    print("KERNEL_OK")
</pallas_src>

<mosaic_0001>
module attributes {stable_mosaic.version = 11 : i64} {
  func.func @_mnistnn_kernel(%arg0: i32, %arg1: memref<8x512xbf16, #tpu.memory_space<vmem>>, %arg2: memref<512x256xbf16, #tpu.memory_space<vmem>>, %arg3: memref<1x256xf32, #tpu.memory_space<vmem>>, %arg4: memref<256x256xbf16, #tpu.memory_space<vmem>>, %arg5: memref<1x256xf32, #tpu.memory_space<vmem>>, %arg6: memref<256x128xbf16, #tpu.memory_space<vmem>>, %arg7: memref<1x128xf32, #tpu.memory_space<vmem>>, %arg8: memref<8x128xbf16, #tpu.memory_space<vmem>>) attributes {dimension_semantics = [#tpu.dimension_semantics<parallel>], iteration_bounds = array<i64: 1>, scalar_prefetch = 0 : i64, scratch_operands = 0 : i64, tpu.core_type = #tpu.core_type<tc>, window_params = [{transform_indices = @transform_0, window_bounds = array<i64: 8, 512>}, {pipeline_mode = #tpu.pipeline_mode<synchronous>, transform_indices = @transform_1, window_bounds = array<i64: 512, 256>}, {pipeline_mode = #tpu.pipeline_mode<synchronous>, transform_indices = @transform_2, window_bounds = array<i64: 1, 256>}, {pipeline_mode = #tpu.pipeline_mode<synchronous>, transform_indices = @transform_3, window_bounds = array<i64: 256, 256>}, {pipeline_mode = #tpu.pipeline_mode<synchronous>, transform_indices = @transform_4, window_bounds = array<i64: 1, 256>}, {pipeline_mode = #tpu.pipeline_mode<synchronous>, transform_indices = @transform_5, window_bounds = array<i64: 256, 128>}, {pipeline_mode = #tpu.pipeline_mode<synchronous>, transform_indices = @transform_6, window_bounds = array<i64: 1, 128>}, {transform_indices = @transform_7, window_bounds = array<i64: 8, 128>}]} {
    %c0 = arith.constant 0 : index
    %c0_0 = arith.constant 0 : index
    %0 = vector.load %arg1[%c0, %c0_0] : memref<8x512xbf16, #tpu.memory_space<vmem>>, vector<8x512xbf16>
    %c0_1 = arith.constant 0 : index
    %c0_2 = arith.constant 0 : index
    %1 = vector.load %arg2[%c0_1, %c0_2] : memref<512x256xbf16, #tpu.memory_space<vmem>>, vector<512x256xbf16>
    %cst = arith.constant dense<0.000000e+00> : vector<8x256xf32>
    %2 = tpu.matmul %0, %1, %cst {dimension_numbers = #tpu.dot_dimension_numbers<[1], [0], [0], [1], [0, 0, 1, 1], [], []>} : vector<8x512xbf16>, vector<512x256xbf16>, vector<8x256xf32> -> vector<8x256xf32>
    %c0_3 = arith.constant 0 : index
    %c0_4 = arith.constant 0 : index
    %3 = vector.load %arg3[%c0_3, %c0_4] : memref<1x256xf32, #tpu.memory_space<vmem>>, vector<1x256xf32>
    %4 = vector.broadcast %3 : vector<1x256xf32> to vector<8x256xf32>
    %5 = arith.addf %2, %4 : vector<8x256xf32>
    %cst_5 = arith.constant 0.000000e+00 : f32
    %6 = vector.broadcast %cst_5 : f32 to vector<8x256xf32>
    %7 = arith.maximumf %5, %6 : vector<8x256xf32>
    %8 = arith.truncf %7 : vector<8x256xf32> to vector<8x256xbf16>
    %c0_6 = arith.constant 0 : index
    %c0_7 = arith.constant 0 : index
    %9 = vector.load %arg4[%c0_6, %c0_7] : memref<256x256xbf16, #tpu.memory_space<vmem>>, vector<256x256xbf16>
    %cst_8 = arith.constant dense<0.000000e+00> : vector<8x256xf32>
    %10 = tpu.matmul %8, %9, %cst_8 {dimension_numbers = #tpu.dot_dimension_numbers<[1], [0], [0], [1], [0, 0, 1, 1], [], []>} : vector<8x256xbf16>, vector<256x256xbf16>, vector<8x256xf32> -> vector<8x256xf32>
    %c0_9 = arith.constant 0 : index
    %c0_10 = arith.constant 0 : index
    %11 = vector.load %arg5[%c0_9, %c0_10] : memref<1x256xf32, #tpu.memory_space<vmem>>, vector<1x256xf32>
    %12 = vector.broadcast %11 : vector<1x256xf32> to vector<8x256xf32>
    %13 = arith.addf %10, %12 : vector<8x256xf32>
    %cst_11 = arith.constant 0.000000e+00 : f32
    %14 = vector.broadcast %cst_11 : f32 to vector<8x256xf32>
    %15 = arith.maximumf %13, %14 : vector<8x256xf32>
    %16 = arith.truncf %15 : vector<8x256xf32> to vector<8x256xbf16>
    %c0_12 = arith.constant 0 : index
    %c0_13 = arith.constant 0 : index
    %17 = vector.load %arg6[%c0_12, %c0_13] : memref<256x128xbf16, #tpu.memory_space<vmem>>, vector<256x128xbf16>
    %cst_14 = arith.constant dense<0.000000e+00> : vector<8x128xf32>
    %18 = tpu.matmul %16, %17, %cst_14 {dimension_numbers = #tpu.dot_dimension_numbers<[1], [0], [0], [1], [0, 0, 1, 1], [], []>} : vector<8x256xbf16>, vector<256x128xbf16>, vector<8x128xf32> -> vector<8x128xf32>
    %c0_15 = arith.constant 0 : index
    %c0_16 = arith.constant 0 : index
    %19 = vector.load %arg7[%c0_15, %c0_16] : memref<1x128xf32, #tpu.memory_space<vmem>>, vector<1x128xf32>
    %20 = vector.broadcast %19 : vector<1x128xf32> to vector<8x128xf32>
    %21 = arith.addf %18, %20 : vector<8x128xf32>
    %cst_17 = arith.constant dense<0xFF800000> : vector<8xf32>
    %22 = vector.multi_reduction <maximumf>, %21, %cst_17 [1] : vector<8x128xf32> to vector<8xf32>
    %23 = vector.shape_cast %22 : vector<8xf32> to vector<8x1xf32>
    %24 = vector.broadcast %23 : vector<8x1xf32> to vector<8x128xf32>
    %25 = arith.subf %21, %24 : vector<8x128xf32>
    %26 = math.exp %25 : vector<8x128xf32>
    %cst_18 = arith.constant dense<0.000000e+00> : vector<8xf32>
    %27 = vector.multi_reduction <add>, %26, %cst_18 [1] : vector<8x128xf32> to vector<8xf32>
    %28 = vector.shape_cast %27 : vector<8xf32> to vector<8x1xf32>
    %29 = tpu.reciprocal %28 : vector<8x1xf32> -> vector<8x1xf32>
    %30 = vector.broadcast %29 : vector<8x1xf32> to vector<8x128xf32>
    %31 = arith.mulf %26, %30 : vector<8x128xf32>
    %32 = arith.truncf %31 : vector<8x128xf32> to vector<8x128xbf16>
    %c0_19 = arith.constant 0 : index
    %c0_20 = arith.constant 0 : index
    %33 = vector.load %arg8[%c0_19, %c0_20] : memref<8x128xbf16, #tpu.memory_space<vmem>>, vector<8x128xbf16>
    tpu.vector_store %arg8[%c0_19, %c0_20], %32 {strides = array<i32>} : memref<8x128xbf16, #tpu.memory_space<vmem>>, vector<8x128xbf16>,
    return
  }
  func.func @transform_0(%arg0: i32) -> (i32, i32) {
    %c0_i32 = arith.constant 0 : i32
    %c0_i32_0 = arith.constant 0 : i32
    return %arg0, %c0_i32 : i32, i32
  }
  func.func @transform_1(%arg0: i32) -> (i32, i32) {
    %c0_i32 = arith.constant 0 : i32
    %c0_i32_0 = arith.constant 0 : i32
    %c0_i32_1 = arith.constant 0 : i32
    return %c0_i32, %c0_i32_0 : i32, i32
  }
  func.func @transform_2(%arg0: i32) -> (i32, i32) {
    %c0_i32 = arith.constant 0 : i32
    %c0_i32_0 = arith.constant 0 : i32
    %c0_i32_1 = arith.constant 0 : i32
    return %c0_i32, %c0_i32_0 : i32, i32
  }
  func.func @transform_3(%arg0: i32) -> (i32, i32) {
    %c0_i32 = arith.constant 0 : i32
    %c0_i32_0 = arith.constant 0 : i32
    %c0_i32_1 = arith.constant 0 : i32
    return %c0_i32, %c0_i32_0 : i32, i32
  }
  func.func @transform_4(%arg0: i32) -> (i32, i32) {
    %c0_i32 = arith.constant 0 : i32
    %c0_i32_0 = arith.constant 0 : i32
    %c0_i32_1 = arith.constant 0 : i32
    return %c0_i32, %c0_i32_0 : i32, i32
  }
  func.func @transform_5(%arg0: i32) -> (i32, i32) {
    %c0_i32 = arith.constant 0 : i32
    %c0_i32_0 = arith.constant 0 : i32
    %c0_i32_1 = arith.constant 0 : i32
    return %c0_i32, %c0_i32_0 : i32, i32
  }
  func.func @transform_6(%arg0: i32) -> (i32, i32) {
    %c0_i32 = arith.constant 0 : i32
    %c0_i32_0 = arith.constant 0 : i32
    %c0_i32_1 = arith.constant 0 : i32
    return %c0_i32, %c0_i32_0 : i32, i32
  }
  func.func @transform_7(%arg0: i32) -> (i32, i32) {
    %c0_i32 = arith.constant 0 : i32
    %c0_i32_0 = arith.constant 0 : i32
    return %arg0, %c0_i32 : i32, i32
  }
}

</mosaic_0001>

<llo_original>
// kernel: tpu_custom_call.1
$region0: #{tpu_custom_call.1}
  #allocation0 [shape = 'u32[]', space=smem, size = 0x4, offset = 0x4, fixed_abs, tag = 'smem constant byte address 0x4 - core index']
  #allocation1 [shape = 'u32[144,128]{1,0:T(1,128)}', space=vmem, size = 0x12000, scoped, tag = 'internal scratch']
  %s0 = inlined_call_operand.hbm [shape: bf16[8,512], index: 0, kind: input, shape index: {}]
  %s1 = inlined_call_operand.hbm [shape: bf16[512,256], index: 1, kind: input, shape index: {}]
  %s2 = inlined_call_operand.vmem [shape: f32[1,256], index: 2, kind: input, shape index: {}]
  %s3 = inlined_call_operand.hbm [shape: bf16[256,256], index: 3, kind: input, shape index: {}]
  %s4 = inlined_call_operand.vmem [shape: f32[1,256], index: 4, kind: input, shape index: {}]
  %s5 = inlined_call_operand.hbm [shape: bf16[256,128], index: 5, kind: input, shape index: {}]
  %s6 = inlined_call_operand.vmem [shape: f32[1,128], index: 6, kind: input, shape index: {}]
  %s7 = inlined_call_operand.hbm [shape: bf16[8,128], index: 7, kind: output, shape index: {}]
  %s8 = sld [smem:[#allocation0]]
  $region54: #{tpu_custom_call.1} parent=0
    _
  %s10 = ssub.s32 1, %s8
  %s11 = scalar_select 0, %s10, %s8
  $region1: #{tpu_custom_call.1} parent=0
    #allocation2 [shape = 'u8[8192]{0}', space=vmem, size = 0x2000, scoped, tag = 'input window, operand 0, single buffered']
    #allocation3 [shape = 's32[1]{0}', space=sflag, size = 0x4, scoped, tag = 'scoped memory for tpu_custom_call.1']
    #allocation4 [shape = 's32[1]{0}', space=sflag, size = 0x4, scoped, tag = 'scoped memory for tpu_custom_call.1']
    #allocation5 [shape = 'u8[262144]{0}', space=vmem, size = 0x40000, scoped, tag = 'input window, operand 1, single buffered']
    #allocation6 [shape = 's32[1]{0}', space=sflag, size = 0x4, scoped, tag = 'scoped memory for tpu_custom_call.1']
    #allocation7 [shape = 'u8[131072]{0}', space=vmem, size = 0x20000, scoped, tag = 'input window, operand 3, single buffered']
    #allocation8 [shape = 'u8[65536]{0}', space=vmem, size = 0x10000, scoped, tag = 'input window, operand 5, single buffered']
    #allocation9 [shape = 's32[1]{0}', space=sflag, size = 0x4, scoped, tag = 'scoped memory for tpu_custom_call.1']
    #allocation10 [shape = 'u8[2048]{0}', space=vmem, size = 0x800, scoped, tag = 'output window, operand 0, single buffered']
    %12 = vsyncpa [#allocation3], 0
    %13 = vsyncpa [#allocation6], 0
    %14 = vsyncpa [#allocation9], 0
    %15 = vsyncpa [#allocation4], 0
    // Predicated region
    $region2: #{tpu_custom_call.1} parent=1 // pred_check
      _
    $region3: #{tpu_custom_call.1} parent=1 // pred_check_branch
      %17 = sbr.rel (0) target = $region5
    $region4: #{tpu_custom_call.1} parent=1 // pred_region
      %s19 = ssub.s32 256, 256
      %20 = vsyncadd [#allocation3], %s19
      %s22 = sshll.u32 [#allocation2], 4
      %s23 = int_to_ptr.vmem [resolvable:$true] %s22
      %25 = dma.hbm_to_vmem [thread:$0]  %s0, 256, %s23, [#allocation3]
    $region5: #{tpu_custom_call.1} parent=1 // pred_fallthru
      _
    // Predicated region
    $region6: #{tpu_custom_call.1} parent=1 // pred_check
      _
    $region7: #{tpu_custom_call.1} parent=1 // pred_check_branch
      %27 = sbr.rel (0) target = $region9
    $region8: #{tpu_custom_call.1} parent=1 // pred_region
      %s29 = ssub.s32 8192, 8192
      %30 = vsyncadd [#allocation6], %s29
      %s31 = sshll.u32 [#allocation5], 4
      %s32 = int_to_ptr.vmem [resolvable:$true] %s31
      %37 = dma.hbm_to_vmem [thread:$0]  %s1, 8192, %s32, [#allocation6], 128, 128, 8
    $region9: #{tpu_custom_call.1} parent=1 // pred_fallthru
      _
    // Predicated region
    $region10: #{tpu_custom_call.1} parent=1 // pred_check
      _
    $region11: #{tpu_custom_call.1} parent=1 // pred_check_branch
      %39 = sbr.rel (0) target = $region13
    $region12: #{tpu_custom_call.1} parent=1 // pred_region
      _
    $region13: #{tpu_custom_call.1} parent=1 // pred_fallthru
      _
    // Predicated region
    $region14: #{tpu_custom_call.1} parent=1 // pred_check
      _
    $region15: #{tpu_custom_call.1} parent=1 // pred_check_branch
      %41 = sbr.rel (0) target = $region17
    $region16: #{tpu_custom_call.1} parent=1 // pred_region
      %s43 = ssub.s32 4096, 4096
      %44 = vsyncadd [#allocation6], %s43
      %s45 = sshll.u32 [#allocation7], 4
      %s46 = int_to_ptr.vmem [resolvable:$true] %s45
      %51 = dma.hbm_to_vmem [thread:$0]  %s3, 4096, %s46, [#allocation6], 128, 128, 8
    $region17: #{tpu_custom_call.1} parent=1 // pred_fallthru
      _
    // Predicated region
    $region18: #{tpu_custom_call.1} parent=1 // pred_check
      _
    $region19: #{tpu_custom_call.1} parent=1 // pred_check_branch
      %53 = sbr.rel (0) target = $region21
    $region20: #{tpu_custom_call.1} parent=1 // pred_region
      _
    $region21: #{tpu_custom_call.1} parent=1 // pred_fallthru
      _
    // Predicated region
    $region22: #{tpu_custom_call.1} parent=1 // pred_check
      _
    $region23: #{tpu_custom_call.1} parent=1 // pred_check_branch
      %55 = sbr.rel (0) target = $region25
    $region24: #{tpu_custom_call.1} parent=1 // pred_region
      %s57 = ssub.s32 2048, 2048
      %58 = vsyncadd [#allocation9], %s57
      %s59 = sshll.u32 [#allocation8], 4
      %s60 = int_to_ptr.vmem [resolvable:$true] %s59
      %65 = dma.hbm_to_vmem [thread:$0]  %s5, 2048, %s60, [#allocation9], 64, 64, 4
    $region25: #{tpu_custom_call.1} parent=1 // pred_fallthru
      _
    // Predicated region
    $region26: #{tpu_custom_call.1} parent=1 // pred_check
      _
    $region27: #{tpu_custom_call.1} parent=1 // pred_check_branch
      %67 = sbr.rel (0) target = $region29
    $region28: #{tpu_custom_call.1} parent=1 // pred_region
      _
    $region29: #{tpu_custom_call.1} parent=1 // pred_fallthru
      _
    // Predicated region
    $region30: #{tpu_custom_call.1} parent=1 // pred_check
      _
    $region31: #{tpu_custom_call.1} parent=1 // pred_check_branch
      %69 = sbr.rel (0) target = $region33
    $region32: #{tpu_custom_call.1} parent=1 // pred_region
      %70 = dma.done [#allocation3], 256
    $region33: #{tpu_custom_call.1} parent=1 // pred_fallthru
      _
    // Predicated region
    $region34: #{tpu_custom_call.1} parent=1 // pred_check
      _
    $region35: #{tpu_custom_call.1} parent=1 // pred_check_branch
      %72 = sbr.rel (0) target = $region37
    $region36: #{tpu_custom_call.1} parent=1 // pred_region
      %73 = dma.done [#allocation6], 8192
    $region37: #{tpu_custom_call.1} parent=1 // pred_fallthru
      _
    // Predicated region
    $region38: #{tpu_custom_call.1} parent=1 // pred_check
      _
    $region39: #{tpu_custom_call.1} parent=1 // pred_check_branch
      %75 = sbr.rel (0) target = $region41
    $region40: #{tpu_custom_call.1} parent=1 // pred_region
      %76 = dma.done [#allocation6], 4096
    $region41: #{tpu_custom_call.1} parent=1 // pred_fallthru
      _
    // Predicated region
    $region42: #{tpu_custom_call.1} parent=1 // pred_check
      _
    $region43: #{tpu_custom_call.1} parent=1 // pred_check_branch
      %78 = sbr.rel (0) target = $region45
    $region44: #{tpu_custom_call.1} parent=1 // pred_region
      %79 = dma.done [#allocation9], 2048
    $region45: #{tpu_custom_call.1} parent=1 // pred_fallthru
      _
    %v81 = vld [vmem:[#allocation2] sm:$0xff]
    %v82 = vld [vmem:[#allocation2 + $0x8] sm:$0xff]
    %v83 = vld [vmem:[#allocation5] sm:$0xff]
    %v84 = vld [vmem:[#allocation5 + $0x8] sm:$0xff]
    %v85 = vld [vmem:[#allocation5 + $0x10] sm:$0xff]
    %v86 = vld [vmem:[#allocation5 + $0x18] sm:$0xff]
    %v87 = vld [vmem:[#allocation5 + $0x20] sm:$0xff]
    %v88 = vld [vmem:[#allocation5 + $0x28] sm:$0xff]
    %v89 = vld [vmem:[#allocation5 + $0x30] sm:$0xff]
    %v90 = vld [vmem:[#allocation5 + $0x38] sm:$0xff]
    %v91 = vld [vmem:[#allocation5 + $0x40] sm:$0xff]
    %v92 = vld [vmem:[#allocation5 + $0x48] sm:$0xff]
    %v93 = vld [vmem:[#allocation5 + $0x50] sm:$0xff]
    %v94 = vld [vmem:[#allocation5 + $0x58] sm:$0xff]
    %v95 = vld [vmem:[#allocation5 + $0x60] sm:$0xff]
    %v96 = vld [vmem:[#allocation5 + $0x68] sm:$0xff]
    %v97 = vld [vmem:[#allocation5 + $0x70] sm:$0xff]
    %v98 = vld [vmem:[#allocation5 + $0x78] sm:$0xff]
    %v99 = vld [vmem:[#allocation5 + $0x80] sm:$0xff]
    %v100 = vld [vmem:[#allocation5 + $0x88] sm:$0xff]
    %v101 = vld [vmem:[#allocation5 + $0x90] sm:$0xff]
    %v102 = vld [vmem:[#allocation5 + $0x98] sm:$0xff]
    %v103 = vld [vmem:[#allocation5 + $0xa0] sm:$0xff]
    %v104 = vld [vmem:[#allocation5 + $0xa8] sm:$0xff]
    %v105 = vld [vmem:[#allocation5 + $0xb0] sm:$0xff]
    %v106 = vld [vmem:[#allocation5 + $0xb8] sm:$0xff]
    %v107 = vld [vmem:[#allocation5 + $0xc0] sm:$0xff]
    %v108 = vld [vmem:[#allocation5 + $0xc8] sm:$0xff]
    %v109 = vld [vmem:[#allocation5 + $0xd0] sm:$0xff]
    %v110 = vld [vmem:[#allocation5 + $0xd8] sm:$0xff]
    %v111 = vld [vmem:[#allocation5 + $0xe0] sm:$0xff]
    %v112 = vld [vmem:[#allocation5 + $0xe8] sm:$0xff]
    %v113 = vld [vmem:[#allocation5 + $0xf0] sm:$0xff]
    %v114 = vld [vmem:[#allocation5 + $0xf8] sm:$0xff]
    %v115 = vld [vmem:[#allocation5 + $0x100] sm:$0xff]
    %v116 = vld [vmem:[#allocation5 + $0x108] sm:$0xff]
    %v117 = vld [vmem:[#allocation5 + $0x110] sm:$0xff]
    %v118 = vld [vmem:[#allocation5 + $0x118] sm:$0xff]
    %v119 = vld [vmem:[#allocation5 + $0x120] sm:$0xff]
    %v120 = vld [vmem:[#allocation5 + $0x128] sm:$0xff]
    %v121 = vld [vmem:[#allocation5 + $0x130] sm:$0xff]
    %v122 = vld [vmem:[#allocation5 + $0x138] sm:$0xff]
    %v123 = vld [vmem:[#allocation5 + $0x140] sm:$0xff]
    %v124 = vld [vmem:[#allocation5 + $0x148] sm:$0xff]
    %v125 = vld [vmem:[#allocation5 + $0x150] sm:$0xff]
    %v126 = vld [vmem:[#allocation5 + $0x158] sm:$0xff]
    %v127 = vld [vmem:[#allocation5 + $0x160] sm:$0xff]
    %v128 = vld [vmem:[#allocation5 + $0x168] sm:$0xff]
    %v129 = vld [vmem:[#allocation5 + $0x170] sm:$0xff]
    %v130 = vld [vmem:[#allocation5 + $0x178] sm:$0xff]
    %v131 = vld [vmem:[#allocation5 + $0x180] sm:$0xff]
    %v132 = vld [vmem:[#allocation5 + $0x188] sm:$0xff]
    %v133 = vld [vmem:[#allocation5 + $0x190] sm:$0xff]
    %v134 = vld [vmem:[#allocation5 + $0x198] sm:$0xff]
    %v135 = vld [vmem:[#allocation5 + $0x1a0] sm:$0xff]
    %v136 = vld [vmem:[#allocation5 + $0x1a8] sm:$0xff]
    %v137 = vld [vmem:[#allocation5 + $0x1b0] sm:$0xff]
    %v138 = vld [vmem:[#allocation5 + $0x1b8] sm:$0xff]
    %v139 = vld [vmem:[#allocation5 + $0x1c0] sm:$0xff]
    %v140 = vld [vmem:[#allocation5 + $0x1c8] sm:$0xff]
    %v141 = vld [vmem:[#allocation5 + $0x1d0] sm:$0xff]
    %v142 = vld [vmem:[#allocation5 + $0x1d8] sm:$0xff]
    %v143 = vld [vmem:[#allocation5 + $0x1e0] sm:$0xff]
    %v144 = vld [vmem:[#allocation5 + $0x1e8] sm:$0xff]
    %v145 = vld [vmem:[#allocation5 + $0x1f0] sm:$0xff]
    %v146 = vld [vmem:[#allocation5 + $0x1f8] sm:$0xff]
    %v147 = vld [vmem:[%s2] sm:$0x3]
    %v149 = vlaneseq
    %v150 = vshrl.u32 %v149, 7
    %v151 = vsub.s32 0, %v150
    %v152 = vrot.slane %v147, %v151
    %v153 = vlaneseq
    %v154 = vshrl.u32 %v153, 7
    %v155 = vsub.s32 1, %v154
    %v156 = vrot.slane %v147, %v155
    %v161 = vunpack.c.l.b16 %v81
    %v162 = vunpack.c.h.b16 %v81
    %v163 = vunpack.c.l.b16 %v82
    %v164 = vunpack.c.h.b16 %v82
    %v165 = vpack.c.b16 %v161, %v161
    %v166 = vpack.c.b16 %v162, %v162
    %v167 = vpack.c.b16 %v163, %v163
    %v168 = vpack.c.b16 %v164, %v164
    %v237 = vunpack.c.l.b16 %v83
    %v238 = vunpack.c.h.b16 %v83
    %v239 = vunpack.c.l.b16 %v84
    %v240 = vunpack.c.h.b16 %v84
    %v241 = vunpack.c.l.b16 %v85
    %v242 = vunpack.c.h.b16 %v85
    %v243 = vunpack.c.l.b16 %v86
    %v244 = vunpack.c.h.b16 %v86
    %v245 = vunpack.c.l.b16 %v87
    %v246 = vunpack.c.h.b16 %v87
    %v247 = vunpack.c.l.b16 %v88
    %v248 = vunpack.c.h.b16 %v88
    %v249 = vunpack.c.l.b16 %v89
    %v250 = vunpack.c.h.b16 %v89
    %v251 = vunpack.c.l.b16 %v90
    %v252 = vunpack.c.h.b16 %v90
    %v253 = vunpack.c.l.b16 %v91
    %v254 = vunpack.c.h.b16 %v91
    %v255 = vunpack.c.l.b16 %v92
    %v256 = vunpack.c.h.b16 %v92
    %v257 = vunpack.c.l.b16 %v93
    %v258 = vunpack.c.h.b16 %v93
    %v259 = vunpack.c.l.b16 %v94
    %v260 = vunpack.c.h.b16 %v94
    %v261 = vunpack.c.l.b16 %v95
    %v262 = vunpack.c.h.b16 %v95
    %v263 = vunpack.c.l.b16 %v96
    %v264 = vunpack.c.h.b16 %v96
    %v265 = vunpack.c.l.b16 %v97
    %v266 = vunpack.c.h.b16 %v97
    %v267 = vunpack.c.l.b16 %v98
    %v268 = vunpack.c.h.b16 %v98
    %v269 = vunpack.c.l.b16 %v99
    %v270 = vunpack.c.h.b16 %v99
    %v271 = vunpack.c.l.b16 %v100
    %v272 = vunpack.c.h.b16 %v100
    %v273 = vunpack.c.l.b16 %v101
    %v274 = vunpack.c.h.b16 %v101
    %v275 = vunpack.c.l.b16 %v102
    %v276 = vunpack.c.h.b16 %v102
    %v277 = vunpack.c.l.b16 %v103
    %v278 = vunpack.c.h.b16 %v103
    %v279 = vunpack.c.l.b16 %v104
    %v280 = vunpack.c.h.b16 %v104
    %v281 = vunpack.c.l.b16 %v105
    %v282 = vunpack.c.h.b16 %v105
    %v283 = vunpack.c.l.b16 %v106
    %v284 = vunpack.c.h.b16 %v106
    %v285 = vunpack.c.l.b16 %v107
    %v286 = vunpack.c.h.b16 %v107
    %v287 = vunpack.c.l.b16 %v108
    %v288 = vunpack.c.h.b16 %v108
    %v289 = vunpack.c.l.b16 %v109
    %v290 = vunpack.c.h.b16 %v109
    %v291 = vunpack.c.l.b16 %v110
    %v292 = vunpack.c.h.b16 %v110
    %v293 = vunpack.c.l.b16 %v111
    %v294 = vunpack.c.h.b16 %v111
    %v295 = vunpack.c.l.b16 %v112
    %v296 = vunpack.c.h.b16 %v112
    %v297 = vunpack.c.l.b16 %v113
    %v298 = vunpack.c.h.b16 %v113
    %v299 = vunpack.c.l.b16 %v114
    %v300 = vunpack.c.h.b16 %v114
    %v301 = vunpack.c.l.b16 %v115
    %v302 = vunpack.c.h.b16 %v115
    %v303 = vunpack.c.l.b16 %v116
    %v304 = vunpack.c.h.b16 %v116
    %v305 = vunpack.c.l.b16 %v117
    %v306 = vunpack.c.h.b16 %v117
    %v307 = vunpack.c.l.b16 %v118
    %v308 = vunpack.c.h.b16 %v118
    %v309 = vunpack.c.l.b16 %v119
    %v310 = vunpack.c.h.b16 %v119
    %v311 = vunpack.c.l.b16 %v120
    %v312 = vunpack.c.h.b16 %v120
    %v313 = vunpack.c.l.b16 %v121
    %v314 = vunpack.c.h.b16 %v121
    %v315 = vunpack.c.l.b16 %v122
    %v316 = vunpack.c.h.b16 %v122
    %v317 = vunpack.c.l.b16 %v123
    %v318 = vunpack.c.h.b16 %v123
    %v319 = vunpack.c.l.b16 %v124
    %v320 = vunpack.c.h.b16 %v124
    %v321 = vunpack.c.l.b16 %v125
    %v322 = vunpack.c.h.b16 %v125
    %v323 = vunpack.c.l.b16 %v126
    %v324 = vunpack.c.h.b16 %v126
    %v325 = vunpack.c.l.b16 %v127
    %v326 = vunpack.c.h.b16 %v127
    %v327 = vunpack.c.l.b16 %v128
    %v328 = vunpack.c.h.b16 %v128
    %v329 = vunpack.c.l.b16 %v129
    %v330 = vunpack.c.h.b16 %v129
    %v331 = vunpack.c.l.b16 %v130
    %v332 = vunpack.c.h.b16 %v130
    %v333 = vunpack.c.l.b16 %v131
    %v334 = vunpack.c.h.b16 %v131
    %v335 = vunpack.c.l.b16 %v132
    %v336 = vunpack.c.h.b16 %v132
    %v337 = vunpack.c.l.b16 %v133
    %v338 = vunpack.c.h.b16 %v133
    %v339 = vunpack.c.l.b16 %v134
    %v340 = vunpack.c.h.b16 %v134
    %v341 = vunpack.c.l.b16 %v135
    %v342 = vunpack.c.h.b16 %v135
    %v343 = vunpack.c.l.b16 %v136
    %v344 = vunpack.c.h.b16 %v136
    %v345 = vunpack.c.l.b16 %v137
    %v346 = vunpack.c.h.b16 %v137
    %v347 = vunpack.c.l.b16 %v138
    %v348 = vunpack.c.h.b16 %v138
    %v349 = vunpack.c.l.b16 %v139
    %v350 = vunpack.c.h.b16 %v139
    %v351 = vunpack.c.l.b16 %v140
    %v352 = vunpack.c.h.b16 %v140
    %v353 = vunpack.c.l.b16 %v141
    %v354 = vunpack.c.h.b16 %v141
    %v355 = vunpack.c.l.b16 %v142
    %v356 = vunpack.c.h.b16 %v142
    %v357 = vunpack.c.l.b16 %v143
    %v358 = vunpack.c.h.b16 %v143
    %v359 = vunpack.c.l.b16 %v144
    %v360 = vunpack.c.h.b16 %v144
    %v361 = vunpack.c.l.b16 %v145
    %v362 = vunpack.c.h.b16 %v145
    %v363 = vunpack.c.l.b16 %v146
    %v364 = vunpack.c.h.b16 %v146
    %v365 = vpack.c.b16 %v239, %v237
    %v366 = vpack.c.b16 %v240, %v238
    %v367 = vpack.c.b16 %v243, %v241
    %v368 = vpack.c.b16 %v244, %v242
    %v369 = vpack.c.b16 %v247, %v245
    %v370 = vpack.c.b16 %v248, %v246
    %v371 = vpack.c.b16 %v251, %v249
    %v372 = vpack.c.b16 %v252, %v250
    %v373 = vpack.c.b16 %v255, %v253
    %v374 = vpack.c.b16 %v256, %v254
    %v375 = vpack.c.b16 %v259, %v257
    %v376 = vpack.c.b16 %v260, %v258
    %v377 = vpack.c.b16 %v263, %v261
    %v378 = vpack.c.b16 %v264, %v262
    %v379 = vpack.c.b16 %v267, %v265
    %v380 = vpack.c.b16 %v268, %v266
    %v381 = vpack.c.b16 %v271, %v269
    %v382 = vpack.c.b16 %v272, %v270
    %v383 = vpack.c.b16 %v275, %v273
    %v384 = vpack.c.b16 %v276, %v274
    %v385 = vpack.c.b16 %v279, %v277
    %v386 = vpack.c.b16 %v280, %v278
    %v387 = vpack.c.b16 %v283, %v281
    %v388 = vpack.c.b16 %v284, %v282
    %v389 = vpack.c.b16 %v287, %v285
    %v390 = vpack.c.b16 %v288, %v286
    %v391 = vpack.c.b16 %v291, %v289
    %v392 = vpack.c.b16 %v292, %v290
    %v393 = vpack.c.b16 %v295, %v293
    %v394 = vpack.c.b16 %v296, %v294
    %v395 = vpack.c.b16 %v299, %v297
    %v396 = vpack.c.b16 %v300, %v298
    %v397 = vpack.c.b16 %v303, %v301
    %v398 = vpack.c.b16 %v304, %v302
    %v399 = vpack.c.b16 %v307, %v305
    %v400 = vpack.c.b16 %v308, %v306
    %v401 = vpack.c.b16 %v311, %v309
    %v402 = vpack.c.b16 %v312, %v310
    %v403 = vpack.c.b16 %v315, %v313
    %v404 = vpack.c.b16 %v316, %v314
    %v405 = vpack.c.b16 %v319, %v317
    %v406 = vpack.c.b16 %v320, %v318
    %v407 = vpack.c.b16 %v323, %v321
    %v408 = vpack.c.b16 %v324, %v322
    %v409 = vpack.c.b16 %v327, %v325
    %v410 = vpack.c.b16 %v328, %v326
    %v411 = vpack.c.b16 %v331, %v329
    %v412 = vpack.c.b16 %v332, %v330
    %v413 = vpack.c.b16 %v335, %v333
    %v414 = vpack.c.b16 %v336, %v334
    %v415 = vpack.c.b16 %v339, %v337
    %v416 = vpack.c.b16 %v340, %v338
    %v417 = vpack.c.b16 %v343, %v341
    %v418 = vpack.c.b16 %v344, %v342
    %v419 = vpack.c.b16 %v347, %v345
    %v420 = vpack.c.b16 %v348, %v346
    %v421 = vpack.c.b16 %v351, %v349
    %v422 = vpack.c.b16 %v352, %v350
    %v423 = vpack.c.b16 %v355, %v353
    %v424 = vpack.c.b16 %v356, %v354
    %v425 = vpack.c.b16 %v359, %v357
    %v426 = vpack.c.b16 %v360, %v358
    %v427 = vpack.c.b16 %v363, %v361
    %v428 = vpack.c.b16 %v364, %v362
    %493 = vmatprep.subr.bf16.mxu0 %v366
    %494 = vmatpush1.bf16.msra.mxu0 %v365
    %495 = vmatprep.subr.bf16.mxu0 %v368
    %496 = vmatpush1.bf16.msra.mxu0 %v367
    %497 = vmatprep.subr.bf16.mxu0 %v370
    %498 = vmatpush1.bf16.msra.mxu0 %v369
    %499 = vmatprep.subr.bf16.mxu0 %v372
    %500 = vmatpush1.bf16.msra.mxu0 %v371
    %501 = vmatprep.subr.bf16.mxu0 %v374
    %502 = vmatpush1.bf16.msra.mxu0 %v373
    %503 = vmatprep.subr.bf16.mxu0 %v376
    %504 = vmatpush1.bf16.msra.mxu0 %v375
    %505 = vmatprep.subr.bf16.mxu0 %v378
    %506 = vmatpush1.bf16.msra.mxu0 %v377
    %507 = vmatprep.subr.bf16.mxu0 %v380
    %508 = vmatpush1.bf16.msra.mxu0 %v379
    %509 = vmatprep.subr.bf16.mxu0 %v382
    %510 = vmatpush1.bf16.msra.mxu0 %v381
    %511 = vmatprep.subr.bf16.mxu0 %v384
    %512 = vmatpush1.bf16.msra.mxu0 %v383
    %513 = vmatprep.subr.bf16.mxu0 %v386
    %514 = vmatpush1.bf16.msra.mxu0 %v385
    %515 = vmatprep.subr.bf16.mxu0 %v388
    %516 = vmatpush1.bf16.msra.mxu0 %v387
    %517 = vmatprep.subr.bf16.mxu0 %v390
    %518 = vmatpush1.bf16.msra.mxu0 %v389
    %519 = vmatprep.subr.bf16.mxu0 %v392
    %520 = vmatpush1.bf16.msra.mxu0 %v391
    %521 = vmatprep.subr.bf16.mxu0 %v394
    %522 = vmatpush1.bf16.msra.mxu0 %v393
    %523 = vmatprep.subr.bf16.mxu0 %v396
    %524 = vmatpush1.bf16.msra.mxu0 %v395
    %525 = vmatprep.mubr.bf16.mxu0 %v166
    %526 = vmatmul.mubr.bf16.gmra.mrb[0].mxu0 %v165
    %v527 = vpop.f32.mrb[0].mxu0
    %v528 = vadd.f32 %v152, %v527
    %v529 = vpop.f32.mrb[0].mxu0
    %v530 = vadd.f32 %v156, %v529
    %v531 = vpop.f32.mrb[0].mxu0
    %v532 = vpop.f32.mrb[0].mxu0
    %533 = vdwg.mxu0
    %534 = vmatprep.subr.bf16.mxu0 %v398
    %535 = vmatpush1.bf16.msra.mxu0 %v397
    %536 = vmatprep.subr.bf16.mxu0 %v400
    %537 = vmatpush1.bf16.msra.mxu0 %v399
    %538 = vmatprep.subr.bf16.mxu0 %v402
    %539 = vmatpush1.bf16.msra.mxu0 %v401
    %540 = vmatprep.subr.bf16.mxu0 %v404
    %541 = vmatpush1.bf16.msra.mxu0 %v403
    %542 = vmatprep.subr.bf16.mxu0 %v406
    %543 = vmatpush1.bf16.msra.mxu0 %v405
    %544 = vmatprep.subr.bf16.mxu0 %v408
    %545 = vmatpush1.bf16.msra.mxu0 %v407
    %546 = vmatprep.subr.bf16.mxu0 %v410
    %547 = vmatpush1.bf16.msra.mxu0 %v409
    %548 = vmatprep.subr.bf16.mxu0 %v412
    %549 = vmatpush1.bf16.msra.mxu0 %v411
    %550 = vmatprep.subr.bf16.mxu0 %v414
    %551 = vmatpush1.bf16.msra.mxu0 %v413
    %552 = vmatprep.subr.bf16.mxu0 %v416
    %553 = vmatpush1.bf16.msra.mxu0 %v415
    %554 = vmatprep.subr.bf16.mxu0 %v418
    %555 = vmatpush1.bf16.msra.mxu0 %v417
    %556 = vmatprep.subr.bf16.mxu0 %v420
    %557 = vmatpush1.bf16.msra.mxu0 %v419
    %558 = vmatprep.subr.bf16.mxu0 %v422
    %559 = vmatpush1.bf16.msra.mxu0 %v421
    %560 = vmatprep.subr.bf16.mxu0 %v424
    %561 = vmatpush1.bf16.msra.mxu0 %v423
    %562 = vmatprep.subr.bf16.mxu0 %v426
    %563 = vmatpush1.bf16.msra.mxu0 %v425
    %564 = vmatprep.subr.bf16.mxu0 %v428
    %565 = vmatpush1.bf16.msra.mxu0 %v427
    %566 = vmatprep.mubr.bf16.mxu0 %v168
    %567 = vmatmul.mubr.bf16.gmra.mrb[0].mxu0 %v167
    %v568 = vpop.f32.mrb[0].mxu0
    %v569 = vadd.f32 %v528, %v568
    %v570 = vpop.f32.mrb[0].mxu0
    %v571 = vadd.f32 %v530, %v570
    %v572 = vpop.f32.mrb[0].mxu0
    %v573 = vpop.f32.mrb[0].mxu0
    %574 = vdwg.mxu0
    %v575 = vmax.f32 %v569, 0.0
    %v576 = vmax.f32 %v571, 0.0
    %v577 = vpack.c.bf16 %v575, %v575
    %v578 = vpack.c.bf16 %v576, %v576
    %v579 = vld [vmem:[#allocation7] sm:$0xff]
    %v580 = vld [vmem:[#allocation7 + $0x8] sm:$0xff]
    %v581 = vld [vmem:[#allocation7 + $0x10] sm:$0xff]
    %v582 = vld [vmem:[#allocation7 + $0x18] sm:$0xff]
    %v583 = vld [vmem:[#allocation7 + $0x20] sm:$0xff]
    %v584 = vld [vmem:[#allocation7 + $0x28] sm:$0xff]
    %v585 = vld [vmem:[#allocation7 + $0x30] sm:$0xff]
    %v586 = vld [vmem:[#allocation7 + $0x38] sm:$0xff]
    %v587 = vld [vmem:[#allocation7 + $0x40] sm:$0xff]
    %v588 = vld [vmem:[#allocation7 + $0x48] sm:$0xff]
    %v589 = vld [vmem:[#allocation7 + $0x50] sm:$0xff]
    %v590 = vld [vmem:[#allocation7 + $0x58] sm:$0xff]
    %v591 = vld [vmem:[#allocation7 + $0x60] sm:$0xff]
    %v592 = vld [vmem:[#allocation7 + $0x68] sm:$0xff]
    %v593 = vld [vmem:[#allocation7 + $0x70] sm:$0xff]
    %v594 = vld [vmem:[#allocation7 + $0x78] sm:$0xff]
    %v595 = vld [vmem:[#allocation7 + $0x80] sm:$0xff]
    %v596 = vld [vmem:[#allocation7 + $0x88] sm:$0xff]
    %v597 = vld [vmem:[#allocation7 + $0x90] sm:$0xff]
    %v598 = vld [vmem:[#allocation7 + $0x98] sm:$0xff]
    %v599 = vld [vmem:[#allocation7 + $0xa0] sm:$0xff]
    %v600 = vld [vmem:[#allocation7 + $0xa8] sm:$0xff]
    %v601 = vld [vmem:[#allocation7 + $0xb0] sm:$0xff]
    %v602 = vld [vmem:[#allocation7 + $0xb8] sm:$0xff]
    %v603 = vld [vmem:[#allocation7 + $0xc0] sm:$0xff]
    %v604 = vld [vmem:[#allocation7 + $0xc8] sm:$0xff]
    %v605 = vld [vmem:[#allocation7 + $0xd0] sm:$0xff]
    %v606 = vld [vmem:[#allocation7 + $0xd8] sm:$0xff]
    %v607 = vld [vmem:[#allocation7 + $0xe0] sm:$0xff]
    %v608 = vld [vmem:[#allocation7 + $0xe8] sm:$0xff]
    %v609 = vld [vmem:[#allocation7 + $0xf0] sm:$0xff]
    %v610 = vld [vmem:[#allocation7 + $0xf8] sm:$0xff]
    %v611 = vld [vmem:[%s4] sm:$0x3]
    %v613 = vlaneseq
    %v614 = vshrl.u32 %v613, 7
    %v615 = vsub.s32 0, %v614
    %v616 = vrot.slane %v611, %v615
    %v617 = vlaneseq
    %v618 = vshrl.u32 %v617, 7
    %v619 = vsub.s32 1, %v618
    %v620 = vrot.slane %v611, %v619
    %v655 = vunpack.c.l.b16 %v579
    %v656 = vunpack.c.h.b16 %v579
    %v657 = vunpack.c.l.b16 %v580
    %v658 = vunpack.c.h.b16 %v580
    %v659 = vunpack.c.l.b16 %v581
    %v660 = vunpack.c.h.b16 %v581
    %v661 = vunpack.c.l.b16 %v582
    %v662 = vunpack.c.h.b16 %v582
    %v663 = vunpack.c.l.b16 %v583
    %v664 = vunpack.c.h.b16 %v583
    %v665 = vunpack.c.l.b16 %v584
    %v666 = vunpack.c.h.b16 %v584
    %v667 = vunpack.c.l.b16 %v585
    %v668 = vunpack.c.h.b16 %v585
    %v669 = vunpack.c.l.b16 %v586
    %v670 = vunpack.c.h.b16 %v586
    %v671 = vunpack.c.l.b16 %v587
    %v672 = vunpack.c.h.b16 %v587
    %v673 = vunpack.c.l.b16 %v588
    %v674 = vunpack.c.h.b16 %v588
    %v675 = vunpack.c.l.b16 %v589
    %v676 = vunpack.c.h.b16 %v589
    %v677 = vunpack.c.l.b16 %v590
    %v678 = vunpack.c.h.b16 %v590
    %v679 = vunpack.c.l.b16 %v591
    %v680 = vunpack.c.h.b16 %v591
    %v681 = vunpack.c.l.b16 %v592
    %v682 = vunpack.c.h.b16 %v592
    %v683 = vunpack.c.l.b16 %v593
    %v684 = vunpack.c.h.b16 %v593
    %v685 = vunpack.c.l.b16 %v594
    %v686 = vunpack.c.h.b16 %v594
    %v687 = vunpack.c.l.b16 %v595
    %v688 = vunpack.c.h.b16 %v595
    %v689 = vunpack.c.l.b16 %v596
    %v690 = vunpack.c.h.b16 %v596
    %v691 = vunpack.c.l.b16 %v597
    %v692 = vunpack.c.h.b16 %v597
    %v693 = vunpack.c.l.b16 %v598
    %v694 = vunpack.c.h.b16 %v598
    %v695 = vunpack.c.l.b16 %v599
    %v696 = vunpack.c.h.b16 %v599
    %v697 = vunpack.c.l.b16 %v600
    %v698 = vunpack.c.h.b16 %v600
    %v699 = vunpack.c.l.b16 %v601
    %v700 = vunpack.c.h.b16 %v601
    %v701 = vunpack.c.l.b16 %v602
    %v702 = vunpack.c.h.b16 %v602
    %v703 = vunpack.c.l.b16 %v603
    %v704 = vunpack.c.h.b16 %v603
    %v705 = vunpack.c.l.b16 %v604
    %v706 = vunpack.c.h.b16 %v604
    %v707 = vunpack.c.l.b16 %v605
    %v708 = vunpack.c.h.b16 %v605
    %v709 = vunpack.c.l.b16 %v606
    %v710 = vunpack.c.h.b16 %v606
    %v711 = vunpack.c.l.b16 %v607
    %v712 = vunpack.c.h.b16 %v607
    %v713 = vunpack.c.l.b16 %v608
    %v714 = vunpack.c.h.b16 %v608
    %v715 = vunpack.c.l.b16 %v609
    %v716 = vunpack.c.h.b16 %v609
    %v717 = vunpack.c.l.b16 %v610
    %v718 = vunpack.c.h.b16 %v610
    %v719 = vpack.c.b16 %v657, %v655
    %v720 = vpack.c.b16 %v658, %v656
    %v721 = vpack.c.b16 %v661, %v659
    %v722 = vpack.c.b16 %v662, %v660
    %v723 = vpack.c.b16 %v665, %v663
    %v724 = vpack.c.b16 %v666, %v664
    %v725 = vpack.c.b16 %v669, %v667
    %v726 = vpack.c.b16 %v670, %v668
    %v727 = vpack.c.b16 %v673, %v671
    %v728 = vpack.c.b16 %v674, %v672
    %v729 = vpack.c.b16 %v677, %v675
    %v730 = vpack.c.b16 %v678, %v676
    %v731 = vpack.c.b16 %v681, %v679
    %v732 = vpack.c.b16 %v682, %v680
    %v733 = vpack.c.b16 %v685, %v683
    %v734 = vpack.c.b16 %v686, %v684
    %v735 = vpack.c.b16 %v689, %v687
    %v736 = vpack.c.b16 %v690, %v688
    %v737 = vpack.c.b16 %v693, %v691
    %v738 = vpack.c.b16 %v694, %v692
    %v739 = vpack.c.b16 %v697, %v695
    %v740 = vpack.c.b16 %v698, %v696
    %v741 = vpack.c.b16 %v701, %v699
    %v742 = vpack.c.b16 %v702, %v700
    %v743 = vpack.c.b16 %v705, %v703
    %v744 = vpack.c.b16 %v706, %v704
    %v745 = vpack.c.b16 %v709, %v707
    %v746 = vpack.c.b16 %v710, %v708
    %v747 = vpack.c.b16 %v713, %v711
    %v748 = vpack.c.b16 %v714, %v712
    %v749 = vpack.c.b16 %v717, %v715
    %v750 = vpack.c.b16 %v718, %v716
    %783 = vmatprep.subr.bf16.mxu0 %v720
    %784 = vmatpush1.bf16.msra.mxu0 %v719
    %785 = vmatprep.subr.bf16.mxu0 %v722
    %786 = vmatpush1.bf16.msra.mxu0 %v721
    %787 = vmatprep.subr.bf16.mxu0 %v724
    %788 = vmatpush1.bf16.msra.mxu0 %v723
    %789 = vmatprep.subr.bf16.mxu0 %v726
    %790 = vmatpush1.bf16.msra.mxu0 %v725
    %791 = vmatprep.subr.bf16.mxu0 %v728
    %792 = vmatpush1.bf16.msra.mxu0 %v727
    %793 = vmatprep.subr.bf16.mxu0 %v730
    %794 = vmatpush1.bf16.msra.mxu0 %v729
    %795 = vmatprep.subr.bf16.mxu0 %v732
    %796 = vmatpush1.bf16.msra.mxu0 %v731
    %797 = vmatprep.subr.bf16.mxu0 %v734
    %798 = vmatpush1.bf16.msra.mxu0 %v733
    %799 = vmatprep.subr.bf16.mxu0 %v736
    %800 = vmatpush1.bf16.msra.mxu0 %v735
    %801 = vmatprep.subr.bf16.mxu0 %v738
    %802 = vmatpush1.bf16.msra.mxu0 %v737
    %803 = vmatprep.subr.bf16.mxu0 %v740
    %804 = vmatpush1.bf16.msra.mxu0 %v739
    %805 = vmatprep.subr.bf16.mxu0 %v742
    %806 = vmatpush1.bf16.msra.mxu0 %v741
    %807 = vmatprep.subr.bf16.mxu0 %v744
    %808 = vmatpush1.bf16.msra.mxu0 %v743
    %809 = vmatprep.subr.bf16.mxu0 %v746
    %810 = vmatpush1.bf16.msra.mxu0 %v745
    %811 = vmatprep.subr.bf16.mxu0 %v748
    %812 = vmatpush1.bf16.msra.mxu0 %v747
    %813 = vmatprep.subr.bf16.mxu0 %v750
    %814 = vmatpush1.bf16.msra.mxu0 %v749
    %815 = vmatprep.mubr.bf16.mxu0 %v578
    %816 = vmatmul.mubr.bf16.gmra.mrb[0].mxu0 %v577
    %v817 = vpop.f32.mrb[0].mxu0
    %v818 = vadd.f32 %v616, %v817
    %v819 = vpop.f32.mrb[0].mxu0
    %v820 = vadd.f32 %v620, %v819
    %v821 = vpop.f32.mrb[0].mxu0
    %v822 = vpop.f32.mrb[0].mxu0
    %823 = vdwg.mxu0
    %v824 = vmax.f32 %v818, 0.0
    %v825 = vmax.f32 %v820, 0.0
    %v826 = vpack.c.bf16 %v824, %v824
    %v827 = vpack.c.bf16 %v825, %v825
    %v828 = vld [vmem:[#allocation8] sm:$0xf]
    %v829 = vld [vmem:[#allocation8 + $0x4] sm:$0xf]
    %v830 = vld [vmem:[#allocation8 + $0x8] sm:$0xf]
    %v831 = vld [vmem:[#allocation8 + $0xc] sm:$0xf]
    %v832 = vld [vmem:[#allocation8 + $0x10] sm:$0xf]
    %v833 = vld [vmem:[#allocation8 + $0x14] sm:$0xf]
    %v834 = vld [vmem:[#allocation8 + $0x18] sm:$0xf]
    %v835 = vld [vmem:[#allocation8 + $0x1c] sm:$0xf]
    %v836 = vld [vmem:[#allocation8 + $0x20] sm:$0xf]
    %v837 = vld [vmem:[#allocation8 + $0x24] sm:$0xf]
    %v838 = vld [vmem:[#allocation8 + $0x28] sm:$0xf]
    %v839 = vld [vmem:[#allocation8 + $0x2c] sm:$0xf]
    %v840 = vld [vmem:[#allocation8 + $0x30] sm:$0xf]
    %v841 = vld [vmem:[#allocation8 + $0x34] sm:$0xf]
    %v842 = vld [vmem:[#allocation8 + $0x38] sm:$0xf]
    %v843 = vld [vmem:[#allocation8 + $0x3c] sm:$0xf]
    %v844 = vld [vmem:[#allocation8 + $0x40] sm:$0xf]
    %v845 = vld [vmem:[#allocation8 + $0x44] sm:$0xf]
    %v846 = vld [vmem:[#allocation8 + $0x48] sm:$0xf]
    %v847 = vld [vmem:[#allocation8 + $0x4c] sm:$0xf]
    %v848 = vld [vmem:[#allocation8 + $0x50] sm:$0xf]
    %v849 = vld [vmem:[#allocation8 + $0x54] sm:$0xf]
    %v850 = vld [vmem:[#allocation8 + $0x58] sm:$0xf]
    %v851 = vld [vmem:[#allocation8 + $0x5c] sm:$0xf]
    %v852 = vld [vmem:[#allocation8 + $0x60] sm:$0xf]
    %v853 = vld [vmem:[#allocation8 + $0x64] sm:$0xf]
    %v854 = vld [vmem:[#allocation8 + $0x68] sm:$0xf]
    %v855 = vld [vmem:[#allocation8 + $0x6c] sm:$0xf]
    %v856 = vld [vmem:[#allocation8 + $0x70] sm:$0xf]
    %v857 = vld [vmem:[#allocation8 + $0x74] sm:$0xf]
    %v858 = vld [vmem:[#allocation8 + $0x78] sm:$0xf]
    %v859 = vld [vmem:[#allocation8 + $0x7c] sm:$0xf]
    %v860 = vld [vmem:[%s6] sm:$0x1]
    %v862 = vlaneseq
    %v863 = vshrl.u32 %v862, 7
    %v864 = vsub.s32 0, %v863
    %v865 = vrot.slane %v860, %v864
    %v899 = vunpack.c.l.b16 %v828
    %v900 = vunpack.c.l.b16 %v829
    %v901 = vunpack.c.l.b16 %v830
    %v902 = vunpack.c.l.b16 %v831
    %v903 = vunpack.c.l.b16 %v832
    %v904 = vunpack.c.l.b16 %v833
    %v905 = vunpack.c.l.b16 %v834
    %v906 = vunpack.c.l.b16 %v835
    %v907 = vunpack.c.l.b16 %v836
    %v908 = vunpack.c.l.b16 %v837
    %v909 = vunpack.c.l.b16 %v838
    %v910 = vunpack.c.l.b16 %v839
    %v911 = vunpack.c.l.b16 %v840
    %v912 = vunpack.c.l.b16 %v841
    %v913 = vunpack.c.l.b16 %v842
    %v914 = vunpack.c.l.b16 %v843
    %v915 = vunpack.c.l.b16 %v844
    %v916 = vunpack.c.l.b16 %v845
    %v917 = vunpack.c.l.b16 %v846
    %v918 = vunpack.c.l.b16 %v847
    %v919 = vunpack.c.l.b16 %v848
    %v920 = vunpack.c.l.b16 %v849
    %v921 = vunpack.c.l.b16 %v850
    %v922 = vunpack.c.l.b16 %v851
    %v923 = vunpack.c.l.b16 %v852
    %v924 = vunpack.c.l.b16 %v853
    %v925 = vunpack.c.l.b16 %v854
    %v926 = vunpack.c.l.b16 %v855
    %v927 = vunpack.c.l.b16 %v856
    %v928 = vunpack.c.l.b16 %v857
    %v929 = vunpack.c.l.b16 %v858
    %v930 = vunpack.c.l.b16 %v859
    %v931 = vpack.c.b16 %v900, %v899
    %v932 = vpack.c.b16 %v902, %v901
    %v933 = vpack.c.b16 %v904, %v903
    %v934 = vpack.c.b16 %v906, %v905
    %v935 = vpack.c.b16 %v908, %v907
    %v936 = vpack.c.b16 %v910, %v909
    %v937 = vpack.c.b16 %v912, %v911
    %v938 = vpack.c.b16 %v914, %v913
    %v939 = vpack.c.b16 %v916, %v915
    %v940 = vpack.c.b16 %v918, %v917
    %v941 = vpack.c.b16 %v920, %v919
    %v942 = vpack.c.b16 %v922, %v921
    %v943 = vpack.c.b16 %v924, %v923
    %v944 = vpack.c.b16 %v926, %v925
    %v945 = vpack.c.b16 %v928, %v927
    %v946 = vpack.c.b16 %v930, %v929
    %963 = vmatprep.subr.bf16.mxu0 0
    %964 = vmatpush1.bf16.msra.mxu0 %v931
    %965 = vmatprep.subr.bf16.mxu0 0
    %966 = vmatpush1.bf16.msra.mxu0 %v932
    %967 = vmatprep.subr.bf16.mxu0 0
    %968 = vmatpush1.bf16.msra.mxu0 %v933
    %969 = vmatprep.subr.bf16.mxu0 0
    %970 = vmatpush1.bf16.msra.mxu0 %v934
    %971 = vmatprep.subr.bf16.mxu0 0
    %972 = vmatpush1.bf16.msra.mxu0 %v935
    %973 = vmatprep.subr.bf16.mxu0 0
    %974 = vmatpush1.bf16.msra.mxu0 %v936
    %975 = vmatprep.subr.bf16.mxu0 0
    %976 = vmatpush1.bf16.msra.mxu0 %v937
    %977 = vmatprep.subr.bf16.mxu0 0
    %978 = vmatpush1.bf16.msra.mxu0 %v938
    %979 = vmatprep.subr.bf16.mxu0 0
    %980 = vmatpush1.bf16.msra.mxu0 %v939
    %981 = vmatprep.subr.bf16.mxu0 0
    %982 = vmatpush1.bf16.msra.mxu0 %v940
    %983 = vmatprep.subr.bf16.mxu0 0
    %984 = vmatpush1.bf16.msra.mxu0 %v941
    %985 = vmatprep.subr.bf16.mxu0 0
    %986 = vmatpush1.bf16.msra.mxu0 %v942
    %987 = vmatprep.subr.bf16.mxu0 0
    %988 = vmatpush1.bf16.msra.mxu0 %v943
    %989 = vmatprep.subr.bf16.mxu0 0
    %990 = vmatpush1.bf16.msra.mxu0 %v944
    %991 = vmatprep.subr.bf16.mxu0 0
    %992 = vmatpush1.bf16.msra.mxu0 %v945
    %993 = vmatprep.subr.bf16.mxu0 0
    %994 = vmatpush1.bf16.msra.mxu0 %v946
    %995 = vmatprep.mubr.bf16.mxu0 %v827
    %996 = vmatmul.mubr.bf16.gmra.mrb[0].mxu0 %v826
    %v997 = vpop.f32.mrb[0].mxu0
    %v998 = vadd.f32 %v865, %v997
    %v999 = vpop.f32.mrb[0].mxu0
    %v1000 = vpop.f32.mrb[0].mxu0
    %v1001 = vpop.f32.mrb[0].mxu0
    %1002 = vdwg.mxu0
    %1003 = vmax.xlane.f32.xlu0 %v998
    %v1004 = vpop.xlane.xlu0 %1003
    %v1005 = vsub.f32 %v998, %v1004
    %v1006 = vmul.f32 %v1005, 1.442695
    %v1007 = vpow.pop %v1006
    %1008 = vadd.xlane.f32.xlu0 %v1007
    %v1009 = vpop.xlane.xlu0 %1008
    %v1010 = vrcp.pop %v1009
    %v1011 = vmul.f32 %v1007, %v1010
    %v1012 = vpack.c.bf16 %v1011, %v1011
    %1013 = vst [vmem:[#allocation10] sm:$0xf] %v1012
    // Predicated region
    $region46: #{tpu_custom_call.1} parent=1 // pred_check
      _
    $region47: #{tpu_custom_call.1} parent=1 // pred_check_branch
      %1015 = sbr.rel (0) target = $region49
    $region48: #{tpu_custom_call.1} parent=1 // pred_region
      %s1017 = ssub.s32 64, 64
      %1018 = vsyncadd [#allocation4], %s1017
      %s1020 = sshll.u32 [#allocation10], 4
      %s1021 = int_to_ptr.vmem [resolvable:$true] %s1020
      %1023 = dma.vmem_to_hbm [thread:$0]  %s1021, 64, %s7, [#allocation4]
    $region49: #{tpu_custom_call.1} parent=1 // pred_fallthru
      _
    // Predicated region
    $region50: #{tpu_custom_call.1} parent=1 // pred_check
      _
    $region51: #{tpu_custom_call.1} parent=1 // pred_check_branch
      %1025 = sbr.rel (0) target = $region53
    $region52: #{tpu_custom_call.1} parent=1 // pred_region
      %1026 = dma.done [#allocation4], 64
    $region53: #{tpu_custom_call.1} parent=1 // pred_fallthru
      _
    %1027 = vsyncpa [#allocation3], 1
    %1028 = vsyncpa [#allocation6], 1
    %1029 = vsyncpa [#allocation9], 1
    %1030 = vsyncpa [#allocation4], 1

</llo_original>
